<compile_context>
chip_gen: v5e
topology: v5e:2x2
jax: 0.10.0
libtpu: 0.0.40
codegen_flags: <defaults>
</compile_context>

<pallas_src>
import functools

import jax
import jax.numpy as jnp
from jax.experimental import pallas as pl
from jax.experimental.pallas import tpu as pltpu


def _round_up(x: int, m: int) -> int:
    return ((x + m - 1) // m) * m


def _balanced_tile(dim: int, target: int, align: int) -> int:
    """Largest align-multiple tile <= target that balances cdiv(dim, target) tiles."""
    dim_al = _round_up(max(dim, 1), align)
    t = _round_up(min(target, dim_al), align)
    n = pl.cdiv(dim, t)
    return _round_up(pl.cdiv(dim, n), align)


def _tpu_info():
    try:
        return pltpu.get_tpu_info()
    except Exception:
        return None


def _vmem_capacity_bytes(info) -> int:
    if info is not None:
        for name in ("vmem_capacity_bytes", "vmem_size_bytes", "vmem_bytes"):
            v = getattr(info, name, None)
            if isinstance(v, int) and v > 0:
                return v
    return 64 << 20  # conservative default (v7x per-TensorCore VMEM)


def _num_tensorcores(info) -> int:
    if info is not None:
        for name in ("num_cores", "core_count", "num_tensorcores", "tensorcores_per_chip"):
            v = getattr(info, name, None)
            if isinstance(v, int) and v > 0:
                return v
    return 1  # conservative: never split if unknown (v5e/v6e have 1 TC)


def _mask_k_tail(a_blk, b_blk, k_idx, tk, k_actual):
    """Zero the ragged K tail (only instantiated when K % tk != 0)."""
    base = k_idx * tk
    kcol = jax.lax.broadcasted_iota(jnp.int32, a_blk.shape, 1) + base
    krow = jax.lax.broadcasted_iota(jnp.int32, b_blk.shape, 0) + base
    a_blk = jnp.where(kcol < k_actual, a_blk, jnp.zeros_like(a_blk))
    b_blk = jnp.where(krow < k_actual, b_blk, jnp.zeros_like(b_blk))
    return a_blk, b_blk


def _matmul_kernel_direct(a_ref, b_ref, o_ref, *, tk, k_actual, k_ragged, precision):
    """f32 output: accumulate straight into the resident output block."""
    k = pl.program_id(2)
    a, b = a_ref[...], b_ref[...]
    if k_ragged:
        a, b = _mask_k_tail(a, b, k, tk, k_actual)
    prod = jnp.dot(a, b, preferred_element_type=jnp.float32, precision=precision)

    @pl.when(k == 0)
    def _():
        o_ref[...] = prod  # first k step: write, no zero-fill + add

    @pl.when(k > 0)
    def _():
        o_ref[...] += prod


def _matmul_kernel_acc(a_ref, b_ref, o_ref, acc_ref, *, tk, k_actual, k_ragged, precision):
    """Narrow output dtype: f32 VMEM accumulator, cast on the last k step."""
    k = pl.program_id(2)
    a, b = a_ref[...], b_ref[...]
    if k_ragged:
        a, b = _mask_k_tail(a, b, k, tk, k_actual)
    prod = jnp.dot(a, b, preferred_element_type=jnp.float32, precision=precision)

    @pl.when(k == 0)
    def _():
        acc_ref[...] = prod

    @pl.when(k > 0)
    def _():
        acc_ref[...] += prod

    @pl.when(k == pl.num_programs(2) - 1)
    def _():
        o_ref[...] = acc_ref[...].astype(o_ref.dtype)


def mm_layer(a, b, *, tm=1024, tn=1024, tk=512, cast_to_bf16=False, precision=None):
    """Equivalent of MmLayer.forward: returns a @ b for 2-D a, b."""
    M, K = a.shape
    K2, N = b.shape
    assert K == K2, "inner dims must match"

    out_dtype = jnp.result_type(a.dtype, b.dtype)
    if not jnp.issubdtype(out_dtype, jnp.floating):
        # TODO(synk): integer matmul has no MXU path (v7x MXU is bf16/fp8 only);
        # exact torch integer `a @ b` semantics are not reproduced here.
        raise NotImplementedError("mm_layer supports floating-point inputs only")

    if cast_to_bf16:
        # Optional fast path: bf16 operands, f32 accumulation (3-6x MXU rate,
        # halves A/B DMA). Off by default to keep f32 operand semantics.
        a = a.astype(jnp.bfloat16)
        b = b.astype(jnp.bfloat16)

    in_dtype = jnp.result_type(a.dtype, b.dtype)
    in_item = jnp.dtype(in_dtype).itemsize
    out_item = jnp.dtype(out_dtype).itemsize
    # bf16 packs 2 rows per sublane: keep the second-minor dims 16-aligned.
    sub_align = 16 if in_item < 4 else 8

    info = _tpu_info()
    budget = int(_vmem_capacity_bytes(info) * 0.8)  # ~0.8x physical VMEM per gen
    num_cores = _num_tensorcores(info)

    # --- Balanced tiles (padding per dim bounded by the alignment, not the tile). ---
    tm = _balanced_tile(M, tm, sub_align)
    tn = _balanced_tile(N, tn, 128)
    tk = _balanced_tile(K, tk, 128)

    # --- Dual-TensorCore split: only on chips with >=2 cores, only when there is
    # a single parallel block; split N first, never below 256. ---
    if num_cores >= 2 and pl.cdiv(M, tm) * pl.cdiv(N, tn) == 1:
        if tn >= 512:
            tn = _balanced_tile(N, _round_up(pl.cdiv(tn, 2), 128), 128)
        elif tm >= 512:
            tm = _balanced_tile(M, _round_up(pl.cdiv(tm, 2), sub_align), sub_align)

    direct_f32 = out_dtype == jnp.float32

    def working_set(tm_, tn_, tk_):
        ws = 2 * (tm_ * tk_ + tk_ * tn_) * in_item + 2 * tm_ * tn_ * out_item
        if not direct_f32:
            ws += tm_ * tn_ * 4
        return ws

    # --- Shrink until the double-buffered working set fits the VMEM budget.
    # tk first (no output reuse), then the larger of tn/tm. ---
    for _ in range(16):
        if working_set(tm, tn, tk) <= budget:
            break
        if tk > 256:
            tk = _balanced_tile(K, max(256, _round_up(tk // 2, 128)), 128)
        elif tn >= tm and tn > 256:
            tn = _balanced_tile(N, max(256, _round_up(tn // 2, 128)), 128)
        elif tm > 256:
            tm = _balanced_tile(M, max(256, _round_up(tm // 2, sub_align)), sub_align)
        else:
            break

    ni, nj, nk = pl.cdiv(M, tm), pl.cdiv(N, tn), pl.cdiv(K, tk)
    grid = (ni, nj, nk)
    k_ragged = (K % tk) != 0

    kernel_kwargs = dict(tk=tk, k_actual=K, k_ragged=k_ragged, precision=precision)
    if direct_f32:
        kernel = functools.partial(_matmul_kernel_direct, **kernel_kwargs)
        scratch_shapes = []
    else:
        kernel = functools.partial(_matmul_kernel_acc, **kernel_kwargs)
        scratch_shapes = [pltpu.VMEM((tm, tn), jnp.float32)]

    needed = working_set(tm, tn, tk)
    vmem_limit = max(min(budget, 2 * needed + (4 << 20)), needed + (2 << 20))

    cost = pl.CostEstimate(
        flops=2 * M * N * K,
        transcendentals=0,
        # Output-stationary: A streamed once per N tile, B once per M tile,
        # output written once.
        bytes_accessed=in_item * (nj * M * K + ni * K * N) + out_item * M * N,
    )

    return pl.pallas_call(
        kernel,
        out_shape=jax.ShapeDtypeStruct((M, N), out_dtype),
        grid_spec=pltpu.PrefetchScalarGridSpec(
            num_scalar_prefetch=0,
            grid=grid,
            in_specs=[
                pl.BlockSpec((tm, tk), lambda i, j, k: (i, k)),
                pl.BlockSpec((tk, tn), lambda i, j, k: (k, j)),
            ],
            out_specs=pl.BlockSpec((tm, tn), lambda i, j, k: (i, j)),
            scratch_shapes=scratch_shapes,
        ),
        compiler_params=pltpu.CompilerParams(
            dimension_semantics=("parallel", "parallel", "arbitrary"),
            vmem_limit_bytes=int(vmem_limit),
        ),
        cost_estimate=cost,
    )(a, b)


if __name__ == "__main__":
    key = jax.random.PRNGKey(0)
    ka, kb, kc, kd = jax.random.split(key, 4)

    # Small, aligned shapes consistent with `a @ b`.
    M, K, N = 128, 256, 128
    a = jax.random.normal(ka, (M, K), dtype=jnp.float32)
    b = jax.random.normal(kb, (K, N), dtype=jnp.float32)
    out = jax.block_until_ready(mm_layer(a, b))
    assert out.shape == (M, N)
    assert jnp.allclose(out, a @ b, atol=1e-4, rtol=1e-4)

    # Ragged shapes: exercises the in-kernel K-tail mask and masked edge writes
    # (no jnp.pad / slice HBM copies are made).
    M2, K2, N2 = 72, 200, 136
    a2 = jax.random.normal(kc, (M2, K2), dtype=jnp.float32)
    b2 = jax.random.normal(kd, (K2, N2), dtype=jnp.float32)
    out2 = jax.block_until_ready(mm_layer(a2, b2))
    assert out2.shape == (M2, N2)
    assert jnp.allclose(out2, a2 @ b2, atol=1e-3, rtol=1e-4)

    print("KERNEL_OK")
</pallas_src>

<mosaic_0001>
module attributes {stable_mosaic.version = 11 : i64} {
  func.func @_matmul_kernel_direct(%arg0: i32, %arg1: i32, %arg2: i32, %arg3: memref<128x256xf32, #tpu.memory_space<vmem>>, %arg4: memref<256x128xf32, #tpu.memory_space<vmem>>, %arg5: memref<128x128xf32, #tpu.memory_space<vmem>>) attributes {dimension_semantics = [#tpu.dimension_semantics<parallel>, #tpu.dimension_semantics<parallel>, #tpu.dimension_semantics<arbitrary>], iteration_bounds = array<i64: 1, 1, 1>, scalar_prefetch = 0 : i64, scratch_operands = 0 : i64, tpu.core_type = #tpu.core_type<tc>, window_params = [{transform_indices = @transform_0, window_bounds = array<i64: 128, 256>}, {transform_indices = @transform_1, window_bounds = array<i64: 256, 128>}, {transform_indices = @transform_2, window_bounds = array<i64: 128, 128>}]} {
    %c0 = arith.constant 0 : index
    %c0_0 = arith.constant 0 : index
    %0 = vector.load %arg3[%c0, %c0_0] : memref<128x256xf32, #tpu.memory_space<vmem>>, vector<128x256xf32>
    %c0_1 = arith.constant 0 : index
    %c0_2 = arith.constant 0 : index
    %1 = vector.load %arg4[%c0_1, %c0_2] : memref<256x128xf32, #tpu.memory_space<vmem>>, vector<256x128xf32>
    %cst = arith.constant dense<0.000000e+00> : vector<128x128xf32>
    %2 = tpu.matmul %0, %1, %cst {dimension_numbers = #tpu.dot_dimension_numbers<[1], [0], [0], [1], [0, 0, 1, 1], [], []>} : vector<128x256xf32>, vector<256x128xf32>, vector<128x128xf32> -> vector<128x128xf32>
    %c0_i32 = arith.constant 0 : i32
    %3 = arith.cmpi eq, %arg2, %c0_i32 : i32
    %4 = arith.extui %3 : i1 to i32
    %c0_i32_3 = arith.constant 0 : i32
    %5 = arith.cmpi ne, %4, %c0_i32_3 : i32
    scf.if %5 {
      %c0_6 = arith.constant 0 : index
      %c0_7 = arith.constant 0 : index
      %9 = vector.load %arg5[%c0_6, %c0_7] : memref<128x128xf32, #tpu.memory_space<vmem>>, vector<128x128xf32>
      tpu.vector_store %arg5[%c0_6, %c0_7], %2 {strides = array<i32>} : memref<128x128xf32, #tpu.memory_space<vmem>>, vector<128x128xf32>,
    } else {
    }
    %c0_i32_4 = arith.constant 0 : i32
    %6 = arith.cmpi sgt, %arg2, %c0_i32_4 : i32
    %7 = arith.extui %6 : i1 to i32
    %c0_i32_5 = arith.constant 0 : i32
    %8 = arith.cmpi ne, %7, %c0_i32_5 : i32
    scf.if %8 {
      %c0_6 = arith.constant 0 : index
      %c0_7 = arith.constant 0 : index
      %9 = vector.load %arg5[%c0_6, %c0_7] : memref<128x128xf32, #tpu.memory_space<vmem>>, vector<128x128xf32>
      %10 = arith.addf %9, %2 : vector<128x128xf32>
      %c0_8 = arith.constant 0 : index
      %c0_9 = arith.constant 0 : index
      %11 = vector.load %arg5[%c0_8, %c0_9] : memref<128x128xf32, #tpu.memory_space<vmem>>, vector<128x128xf32>
      tpu.vector_store %arg5[%c0_8, %c0_9], %10 {strides = array<i32>} : memref<128x128xf32, #tpu.memory_space<vmem>>, vector<128x128xf32>,
    } else {
    }
    return
  }
  func.func @transform_0(%arg0: i32, %arg1: i32, %arg2: i32) -> (i32, i32) {
    %c0_i32 = arith.constant 0 : i32
    return %arg0, %arg2 : i32, i32
  }
  func.func @transform_1(%arg0: i32, %arg1: i32, %arg2: i32) -> (i32, i32) {
    %c0_i32 = arith.constant 0 : i32
    return %arg2, %arg1 : i32, i32
  }
  func.func @transform_2(%arg0: i32, %arg1: i32, %arg2: i32) -> (i32, i32) {
    %c0_i32 = arith.constant 0 : i32
    return %arg0, %arg1 : i32, i32
  }
}

</mosaic_0001>

<llo_original>
// kernel: tpu_custom_call.1
$region0: #{tpu_custom_call.1}
  #allocation0 [shape = 'u32[]', space=smem, size = 0x4, offset = 0x4, fixed_abs, tag = 'smem constant byte address 0x4 - core index']
  #allocation1 [shape = 'u32[72,128]{1,0:T(1,128)}', space=vmem, size = 0x9000, scoped, tag = 'internal scratch']
  %s0 = inlined_call_operand.hbm [shape: f32[128,256], index: 0, kind: input, shape index: {}]
  %s1 = inlined_call_operand.hbm [shape: f32[256,128], index: 1, kind: input, shape index: {}]
  %s2 = inlined_call_operand.hbm [shape: f32[128,128], index: 2, kind: output, shape index: {}]
  %s3 = sld [smem:[#allocation0]]
  $region34: #{tpu_custom_call.1} parent=0
    _
  %s5 = ssub.s32 1, %s3
  %s6 = scalar_select 0, %s5, %s3
  $region1: #{tpu_custom_call.1} parent=0
    #allocation2 [shape = 'u8[131072]{0}', space=vmem, size = 0x20000, scoped, tag = 'input window, operand 0, single buffered']
    #allocation3 [shape = 's32[1]{0}', space=sflag, size = 0x4, scoped, tag = 'scoped memory for tpu_custom_call.1']
    #allocation4 [shape = 's32[1]{0}', space=sflag, size = 0x4, scoped, tag = 'scoped memory for tpu_custom_call.1']
    #allocation5 [shape = 'u8[131072]{0}', space=vmem, size = 0x20000, scoped, tag = 'input window, operand 1, single buffered']
    #allocation6 [shape = 's32[1]{0}', space=sflag, size = 0x4, scoped, tag = 'scoped memory for tpu_custom_call.1']
    #allocation7 [shape = 'u8[65536]{0}', space=vmem, size = 0x10000, scoped, tag = 'output window, operand 0, single buffered']
    %7 = vsyncpa [#allocation3], 0
    %8 = vsyncpa [#allocation6], 0
    %9 = vsyncpa [#allocation4], 0
    // Predicated region
    $region2: #{tpu_custom_call.1} parent=1 // pred_check
      _
    $region3: #{tpu_custom_call.1} parent=1 // pred_check_branch
      %11 = sbr.rel (0) target = $region5
    $region4: #{tpu_custom_call.1} parent=1 // pred_region
      %13 = vsyncadd [#allocation3], 0
      %s14 = sshll.u32 %s0, 4
      %s15 = int_to_ptr.hbm [resolvable:$true] %s14
      %s16 = sshll.u32 [#allocation2], 4
      %s17 = int_to_ptr.vmem [resolvable:$true] %s16
      %22 = dma.hbm_to_vmem [thread:$0]  %s15, 4096, %s17, [#allocation3], 256, 256, 16
    $region5: #{tpu_custom_call.1} parent=1 // pred_fallthru
      _
    // Predicated region
    $region6: #{tpu_custom_call.1} parent=1 // pred_check
      _
    $region7: #{tpu_custom_call.1} parent=1 // pred_check_branch
      %24 = sbr.rel (0) target = $region9
    $region8: #{tpu_custom_call.1} parent=1 // pred_region
      %26 = vsyncadd [#allocation6], 0
      %s27 = sshll.u32 %s1, 4
      %s28 = int_to_ptr.hbm [resolvable:$true] %s27
      %s29 = sshll.u32 [#allocation5], 4
      %s30 = int_to_ptr.vmem [resolvable:$true] %s29
      %35 = dma.hbm_to_vmem [thread:$0]  %s28, 4096, %s30, [#allocation6], 128, 128, 8
    $region9: #{tpu_custom_call.1} parent=1 // pred_fallthru
      _
    // Predicated region
    $region10: #{tpu_custom_call.1} parent=1 // pred_check
      _
    $region11: #{tpu_custom_call.1} parent=1 // pred_check_branch
      %37 = sbr.rel (0) target = $region13
    $region12: #{tpu_custom_call.1} parent=1 // pred_region
      %39 = dma.done [#allocation3], 4096
    $region13: #{tpu_custom_call.1} parent=1 // pred_fallthru
      _
    // Predicated region
    $region14: #{tpu_custom_call.1} parent=1 // pred_check
      _
    $region15: #{tpu_custom_call.1} parent=1 // pred_check_branch
      %41 = sbr.rel (0) target = $region17
    $region16: #{tpu_custom_call.1} parent=1 // pred_region
      %43 = dma.done [#allocation6], 4096
    $region17: #{tpu_custom_call.1} parent=1 // pred_fallthru
      _
    %v44 = vld [vmem:[#allocation2] sm:$0xff]
    %v45 = vld [vmem:[#allocation2 + $0x8] sm:$0xff]
    %v46 = vld [vmem:[#allocation2 + $0x10] sm:$0xff]
    %v47 = vld [vmem:[#allocation2 + $0x18] sm:$0xff]
    %v48 = vld [vmem:[#allocation2 + $0x20] sm:$0xff]
    %v49 = vld [vmem:[#allocation2 + $0x28] sm:$0xff]
    %v50 = vld [vmem:[#allocation2 + $0x30] sm:$0xff]
    %v51 = vld [vmem:[#allocation2 + $0x38] sm:$0xff]
    %v52 = vld [vmem:[#allocation2 + $0x40] sm:$0xff]
    %v53 = vld [vmem:[#allocation2 + $0x48] sm:$0xff]
    %v54 = vld [vmem:[#allocation2 + $0x50] sm:$0xff]
    %v55 = vld [vmem:[#allocation2 + $0x58] sm:$0xff]
    %v56 = vld [vmem:[#allocation2 + $0x60] sm:$0xff]
    %v57 = vld [vmem:[#allocation2 + $0x68] sm:$0xff]
    %v58 = vld [vmem:[#allocation2 + $0x70] sm:$0xff]
    %v59 = vld [vmem:[#allocation2 + $0x78] sm:$0xff]
    %v60 = vld [vmem:[#allocation2 + $0x80] sm:$0xff]
    %v61 = vld [vmem:[#allocation2 + $0x88] sm:$0xff]
    %v62 = vld [vmem:[#allocation2 + $0x90] sm:$0xff]
    %v63 = vld [vmem:[#allocation2 + $0x98] sm:$0xff]
    %v64 = vld [vmem:[#allocation2 + $0xa0] sm:$0xff]
    %v65 = vld [vmem:[#allocation2 + $0xa8] sm:$0xff]
    %v66 = vld [vmem:[#allocation2 + $0xb0] sm:$0xff]
    %v67 = vld [vmem:[#allocation2 + $0xb8] sm:$0xff]
    %v68 = vld [vmem:[#allocation2 + $0xc0] sm:$0xff]
    %v69 = vld [vmem:[#allocation2 + $0xc8] sm:$0xff]
    %v70 = vld [vmem:[#allocation2 + $0xd0] sm:$0xff]
    %v71 = vld [vmem:[#allocation2 + $0xd8] sm:$0xff]
    %v72 = vld [vmem:[#allocation2 + $0xe0] sm:$0xff]
    %v73 = vld [vmem:[#allocation2 + $0xe8] sm:$0xff]
    %v74 = vld [vmem:[#allocation2 + $0xf0] sm:$0xff]
    %v75 = vld [vmem:[#allocation2 + $0xf8] sm:$0xff]
    %v76 = vld [vmem:[#allocation5] sm:$0xff]
    %v77 = vld [vmem:[#allocation5 + $0x8] sm:$0xff]
    %v78 = vld [vmem:[#allocation5 + $0x10] sm:$0xff]
    %v79 = vld [vmem:[#allocation5 + $0x18] sm:$0xff]
    %v80 = vld [vmem:[#allocation5 + $0x20] sm:$0xff]
    %v81 = vld [vmem:[#allocation5 + $0x28] sm:$0xff]
    %v82 = vld [vmem:[#allocation5 + $0x30] sm:$0xff]
    %v83 = vld [vmem:[#allocation5 + $0x38] sm:$0xff]
    %v84 = vld [vmem:[#allocation5 + $0x40] sm:$0xff]
    %v85 = vld [vmem:[#allocation5 + $0x48] sm:$0xff]
    %v86 = vld [vmem:[#allocation5 + $0x50] sm:$0xff]
    %v87 = vld [vmem:[#allocation5 + $0x58] sm:$0xff]
    %v88 = vld [vmem:[#allocation5 + $0x60] sm:$0xff]
    %v89 = vld [vmem:[#allocation5 + $0x68] sm:$0xff]
    %v90 = vld [vmem:[#allocation5 + $0x70] sm:$0xff]
    %v91 = vld [vmem:[#allocation5 + $0x78] sm:$0xff]
    %v92 = vld [vmem:[#allocation5 + $0x80] sm:$0xff]
    %v93 = vld [vmem:[#allocation5 + $0x88] sm:$0xff]
    %v94 = vld [vmem:[#allocation5 + $0x90] sm:$0xff]
    %v95 = vld [vmem:[#allocation5 + $0x98] sm:$0xff]
    %v96 = vld [vmem:[#allocation5 + $0xa0] sm:$0xff]
    %v97 = vld [vmem:[#allocation5 + $0xa8] sm:$0xff]
    %v98 = vld [vmem:[#allocation5 + $0xb0] sm:$0xff]
    %v99 = vld [vmem:[#allocation5 + $0xb8] sm:$0xff]
    %v100 = vld [vmem:[#allocation5 + $0xc0] sm:$0xff]
    %v101 = vld [vmem:[#allocation5 + $0xc8] sm:$0xff]
    %v102 = vld [vmem:[#allocation5 + $0xd0] sm:$0xff]
    %v103 = vld [vmem:[#allocation5 + $0xd8] sm:$0xff]
    %v104 = vld [vmem:[#allocation5 + $0xe0] sm:$0xff]
    %v105 = vld [vmem:[#allocation5 + $0xe8] sm:$0xff]
    %v106 = vld [vmem:[#allocation5 + $0xf0] sm:$0xff]
    %v107 = vld [vmem:[#allocation5 + $0xf8] sm:$0xff]
    %108 = vmatpush.msra.mxu0 %v91
    %109 = vmatpush.msra.mxu0 %v90
    %110 = vmatpush.msra.mxu0 %v89
    %111 = vmatpush.msra.mxu0 %v88
    %112 = vmatpush.msra.mxu0 %v87
    %113 = vmatpush.msra.mxu0 %v86
    %114 = vmatpush.msra.mxu0 %v85
    %115 = vmatpush.msra.mxu0 %v84
    %116 = vmatpush.msra.mxu0 %v83
    %117 = vmatpush.msra.mxu0 %v82
    %118 = vmatpush.msra.mxu0 %v81
    %119 = vmatpush.msra.mxu0 %v80
    %120 = vmatpush.msra.mxu0 %v79
    %121 = vmatpush.msra.mxu0 %v78
    %122 = vmatpush.msra.mxu0 %v77
    %123 = vmatpush.msra.mxu0 %v76
    %124 = vmatmul.f32.gmra.mxu0 %v44
    %v125 = vpop.f32.mrf.mxu0
    %v126 = vadd.f32 0.0, %v125
    %127 = vmatmul.f32.gmra.mxu0 %v46
    %v128 = vpop.f32.mrf.mxu0
    %v129 = vadd.f32 0.0, %v128
    %130 = vmatmul.f32.gmra.mxu0 %v48
    %v131 = vpop.f32.mrf.mxu0
    %v132 = vadd.f32 0.0, %v131
    %133 = vmatmul.f32.gmra.mxu0 %v50
    %v134 = vpop.f32.mrf.mxu0
    %v135 = vadd.f32 0.0, %v134
    %136 = vmatmul.f32.gmra.mxu0 %v52
    %v137 = vpop.f32.mrf.mxu0
    %v138 = vadd.f32 0.0, %v137
    %139 = vmatmul.f32.gmra.mxu0 %v54
    %v140 = vpop.f32.mrf.mxu0
    %v141 = vadd.f32 0.0, %v140
    %142 = vmatmul.f32.gmra.mxu0 %v56
    %v143 = vpop.f32.mrf.mxu0
    %v144 = vadd.f32 0.0, %v143
    %145 = vmatmul.f32.gmra.mxu0 %v58
    %v146 = vpop.f32.mrf.mxu0
    %v147 = vadd.f32 0.0, %v146
    %148 = vmatmul.f32.gmra.mxu0 %v60
    %v149 = vpop.f32.mrf.mxu0
    %v150 = vadd.f32 0.0, %v149
    %151 = vmatmul.f32.gmra.mxu0 %v62
    %v152 = vpop.f32.mrf.mxu0
    %v153 = vadd.f32 0.0, %v152
    %154 = vmatmul.f32.gmra.mxu0 %v64
    %v155 = vpop.f32.mrf.mxu0
    %v156 = vadd.f32 0.0, %v155
    %157 = vmatmul.f32.gmra.mxu0 %v66
    %v158 = vpop.f32.mrf.mxu0
    %v159 = vadd.f32 0.0, %v158
    %160 = vmatmul.f32.gmra.mxu0 %v68
    %v161 = vpop.f32.mrf.mxu0
    %v162 = vadd.f32 0.0, %v161
    %163 = vmatmul.f32.gmra.mxu0 %v70
    %v164 = vpop.f32.mrf.mxu0
    %v165 = vadd.f32 0.0, %v164
    %166 = vmatmul.f32.gmra.mxu0 %v72
    %v167 = vpop.f32.mrf.mxu0
    %v168 = vadd.f32 0.0, %v167
    %169 = vmatmul.f32.gmra.mxu0 %v74
    %v170 = vpop.f32.mrf.mxu0
    %v171 = vadd.f32 0.0, %v170
    %172 = vdwg.mxu0
    %173 = vmatpush.msra.mxu0 %v107
    %174 = vmatpush.msra.mxu0 %v106
    %175 = vmatpush.msra.mxu0 %v105
    %176 = vmatpush.msra.mxu0 %v104
    %177 = vmatpush.msra.mxu0 %v103
    %178 = vmatpush.msra.mxu0 %v102
    %179 = vmatpush.msra.mxu0 %v101
    %180 = vmatpush.msra.mxu0 %v100
    %181 = vmatpush.msra.mxu0 %v99
    %182 = vmatpush.msra.mxu0 %v98
    %183 = vmatpush.msra.mxu0 %v97
    %184 = vmatpush.msra.mxu0 %v96
    %185 = vmatpush.msra.mxu0 %v95
    %186 = vmatpush.msra.mxu0 %v94
    %187 = vmatpush.msra.mxu0 %v93
    %188 = vmatpush.msra.mxu0 %v92
    %189 = vmatmul.f32.gmra.mxu0 %v45
    %v190 = vpop.f32.mrf.mxu0
    %v191 = vadd.f32 %v126, %v190
    %192 = vmatmul.f32.gmra.mxu0 %v47
    %v193 = vpop.f32.mrf.mxu0
    %v194 = vadd.f32 %v129, %v193
    %195 = vmatmul.f32.gmra.mxu0 %v49
    %v196 = vpop.f32.mrf.mxu0
    %v197 = vadd.f32 %v132, %v196
    %198 = vmatmul.f32.gmra.mxu0 %v51
    %v199 = vpop.f32.mrf.mxu0
    %v200 = vadd.f32 %v135, %v199
    %201 = vmatmul.f32.gmra.mxu0 %v53
    %v202 = vpop.f32.mrf.mxu0
    %v203 = vadd.f32 %v138, %v202
    %204 = vmatmul.f32.gmra.mxu0 %v55
    %v205 = vpop.f32.mrf.mxu0
    %v206 = vadd.f32 %v141, %v205
    %207 = vmatmul.f32.gmra.mxu0 %v57
    %v208 = vpop.f32.mrf.mxu0
    %v209 = vadd.f32 %v144, %v208
    %210 = vmatmul.f32.gmra.mxu0 %v59
    %v211 = vpop.f32.mrf.mxu0
    %v212 = vadd.f32 %v147, %v211
    %213 = vmatmul.f32.gmra.mxu0 %v61
    %v214 = vpop.f32.mrf.mxu0
    %v215 = vadd.f32 %v150, %v214
    %216 = vmatmul.f32.gmra.mxu0 %v63
    %v217 = vpop.f32.mrf.mxu0
    %v218 = vadd.f32 %v153, %v217
    %219 = vmatmul.f32.gmra.mxu0 %v65
    %v220 = vpop.f32.mrf.mxu0
    %v221 = vadd.f32 %v156, %v220
    %222 = vmatmul.f32.gmra.mxu0 %v67
    %v223 = vpop.f32.mrf.mxu0
    %v224 = vadd.f32 %v159, %v223
    %225 = vmatmul.f32.gmra.mxu0 %v69
    %v226 = vpop.f32.mrf.mxu0
    %v227 = vadd.f32 %v162, %v226
    %228 = vmatmul.f32.gmra.mxu0 %v71
    %v229 = vpop.f32.mrf.mxu0
    %v230 = vadd.f32 %v165, %v229
    %231 = vmatmul.f32.gmra.mxu0 %v73
    %v232 = vpop.f32.mrf.mxu0
    %v233 = vadd.f32 %v168, %v232
    %234 = vmatmul.f32.gmra.mxu0 %v75
    %v235 = vpop.f32.mrf.mxu0
    %v236 = vadd.f32 %v171, %v235
    %237 = vdwg.mxu0
    %p238 = scmp.eq.s32.totalorder 0, 0
    // Predicated region
    $region18: #{tpu_custom_call.1} parent=1 // pred_check
      %p239 = pneg %p238
    $region19: #{tpu_custom_call.1} parent=1 // pred_check_branch
      %241 = sbr.rel (%p239) target = $region21
    $region20: #{tpu_custom_call.1} parent=1 // pred_region
      %242 = vst [vmem:[#allocation7] sm:$0xff] %v191
      %243 = vst [vmem:[#allocation7 + $0x8] sm:$0xff] %v194
      %244 = vst [vmem:[#allocation7 + $0x10] sm:$0xff] %v197
      %245 = vst [vmem:[#allocation7 + $0x18] sm:$0xff] %v200
      %246 = vst [vmem:[#allocation7 + $0x20] sm:$0xff] %v203
      %247 = vst [vmem:[#allocation7 + $0x28] sm:$0xff] %v206
      %248 = vst [vmem:[#allocation7 + $0x30] sm:$0xff] %v209
      %249 = vst [vmem:[#allocation7 + $0x38] sm:$0xff] %v212
      %250 = vst [vmem:[#allocation7 + $0x40] sm:$0xff] %v215
      %251 = vst [vmem:[#allocation7 + $0x48] sm:$0xff] %v218
      %252 = vst [vmem:[#allocation7 + $0x50] sm:$0xff] %v221
      %253 = vst [vmem:[#allocation7 + $0x58] sm:$0xff] %v224
      %254 = vst [vmem:[#allocation7 + $0x60] sm:$0xff] %v227
      %255 = vst [vmem:[#allocation7 + $0x68] sm:$0xff] %v230
      %256 = vst [vmem:[#allocation7 + $0x70] sm:$0xff] %v233
      %257 = vst [vmem:[#allocation7 + $0x78] sm:$0xff] %v236
    $region21: #{tpu_custom_call.1} parent=1 // pred_fallthru
      _
    %p258 = scmp.gt.s32.totalorder 0, 0
    // Predicated region
    $region22: #{tpu_custom_call.1} parent=1 // pred_check
      %p259 = pneg %p258
    $region23: #{tpu_custom_call.1} parent=1 // pred_check_branch
      %261 = sbr.rel (%p259) target = $region25
    $region24: #{tpu_custom_call.1} parent=1 // pred_region
      %v262 = vld [vmem:[#allocation7] sm:$0xff]
      %v263 = vld [vmem:[#allocation7 + $0x8] sm:$0xff]
      %v264 = vld [vmem:[#allocation7 + $0x10] sm:$0xff]
      %v265 = vld [vmem:[#allocation7 + $0x18] sm:$0xff]
      %v266 = vld [vmem:[#allocation7 + $0x20] sm:$0xff]
      %v267 = vld [vmem:[#allocation7 + $0x28] sm:$0xff]
      %v268 = vld [vmem:[#allocation7 + $0x30] sm:$0xff]
      %v269 = vld [vmem:[#allocation7 + $0x38] sm:$0xff]
      %v270 = vld [vmem:[#allocation7 + $0x40] sm:$0xff]
      %v271 = vld [vmem:[#allocation7 + $0x48] sm:$0xff]
      %v272 = vld [vmem:[#allocation7 + $0x50] sm:$0xff]
      %v273 = vld [vmem:[#allocation7 + $0x58] sm:$0xff]
      %v274 = vld [vmem:[#allocation7 + $0x60] sm:$0xff]
      %v275 = vld [vmem:[#allocation7 + $0x68] sm:$0xff]
      %v276 = vld [vmem:[#allocation7 + $0x70] sm:$0xff]
      %v277 = vld [vmem:[#allocation7 + $0x78] sm:$0xff]
      %v278 = vadd.f32 %v262, %v191
      %v279 = vadd.f32 %v263, %v194
      %v280 = vadd.f32 %v264, %v197
      %v281 = vadd.f32 %v265, %v200
      %v282 = vadd.f32 %v266, %v203
      %v283 = vadd.f32 %v267, %v206
      %v284 = vadd.f32 %v268, %v209
      %v285 = vadd.f32 %v269, %v212
      %v286 = vadd.f32 %v270, %v215
      %v287 = vadd.f32 %v271, %v218
      %v288 = vadd.f32 %v272, %v221
      %v289 = vadd.f32 %v273, %v224
      %v290 = vadd.f32 %v274, %v227
      %v291 = vadd.f32 %v275, %v230
      %v292 = vadd.f32 %v276, %v233
      %v293 = vadd.f32 %v277, %v236
      %294 = vst [vmem:[#allocation7] sm:$0xff] %v278
      %295 = vst [vmem:[#allocation7 + $0x8] sm:$0xff] %v279
      %296 = vst [vmem:[#allocation7 + $0x10] sm:$0xff] %v280
      %297 = vst [vmem:[#allocation7 + $0x18] sm:$0xff] %v281
      %298 = vst [vmem:[#allocation7 + $0x20] sm:$0xff] %v282
      %299 = vst [vmem:[#allocation7 + $0x28] sm:$0xff] %v283
      %300 = vst [vmem:[#allocation7 + $0x30] sm:$0xff] %v284
      %301 = vst [vmem:[#allocation7 + $0x38] sm:$0xff] %v285
      %302 = vst [vmem:[#allocation7 + $0x40] sm:$0xff] %v286
      %303 = vst [vmem:[#allocation7 + $0x48] sm:$0xff] %v287
      %304 = vst [vmem:[#allocation7 + $0x50] sm:$0xff] %v288
      %305 = vst [vmem:[#allocation7 + $0x58] sm:$0xff] %v289
      %306 = vst [vmem:[#allocation7 + $0x60] sm:$0xff] %v290
      %307 = vst [vmem:[#allocation7 + $0x68] sm:$0xff] %v291
      %308 = vst [vmem:[#allocation7 + $0x70] sm:$0xff] %v292
      %309 = vst [vmem:[#allocation7 + $0x78] sm:$0xff] %v293
    $region25: #{tpu_custom_call.1} parent=1 // pred_fallthru
      _
    // Predicated region
    $region26: #{tpu_custom_call.1} parent=1 // pred_check
      _
    $region27: #{tpu_custom_call.1} parent=1 // pred_check_branch
      %311 = sbr.rel (0) target = $region29
    $region28: #{tpu_custom_call.1} parent=1 // pred_region
      %313 = vsyncadd [#allocation4], 0
      %s314 = sshll.u32 [#allocation7], 4
      %s315 = int_to_ptr.vmem [resolvable:$true] %s314
      %s316 = sshll.u32 %s2, 4
      %s317 = int_to_ptr.hbm [resolvable:$true] %s316
      %322 = dma.vmem_to_hbm [thread:$0]  %s315, 2048, %s317, [#allocation4], 128, 128, 8
    $region29: #{tpu_custom_call.1} parent=1 // pred_fallthru
      _
    // Predicated region
    $region30: #{tpu_custom_call.1} parent=1 // pred_check
      _
    $region31: #{tpu_custom_call.1} parent=1 // pred_check_branch
      %324 = sbr.rel (0) target = $region33
    $region32: #{tpu_custom_call.1} parent=1 // pred_region
      %326 = dma.done [#allocation4], 2048
    $region33: #{tpu_custom_call.1} parent=1 // pred_fallthru
      _
    %327 = vsyncpa [#allocation3], 1
    %328 = vsyncpa [#allocation6], 1
    %329 = vsyncpa [#allocation4], 1

</llo_original>
